<compile_context>
chip_gen: v7x
topology: tpu7x:2x2x1
jax: 0.10.0
libtpu: 0.0.40
codegen_flags: <defaults>
</compile_context>

<pallas_src>
import functools

import jax
import jax.numpy as jnp
from jax.experimental import pallas as pl
from jax.experimental.pallas import tpu as pltpu

_SUBLANE = 8


def actor_kernel(obs_ref, w1_ref, b1_ref, w2_ref, b2_ref, w3_ref, b3_ref,
                 mean_ref):
    """One batch tile of the fused MLP: two tanh layers + mean head."""
    wdt = w1_ref.dtype  # matmul operand dtype (f32 or bf16); epilogues in f32.
    x = obs_ref[...]

    # layer 1: Linear + Tanh  (MXU matmul, f32 accumulate; tanh on EUP in f32)
    h1 = jnp.dot(x, w1_ref[...], preferred_element_type=jnp.float32)
    h1 = jnp.tanh(h1 + b1_ref[...])

    # layer 2: Linear + Tanh
    h2 = jnp.dot(h1.astype(wdt), w2_ref[...], preferred_element_type=jnp.float32)
    h2 = jnp.tanh(h2 + b2_ref[...])

    # mean head: Linear, stored at its natural (tb, act_dim) width.
    mean = jnp.dot(h2.astype(wdt), w3_ref[...], preferred_element_type=jnp.float32)
    mean_ref[...] = (mean + b3_ref[...]).astype(mean_ref.dtype)


def _round_up(x, m):
    return ((x + m - 1) // m) * m


@functools.partial(jax.jit, static_argnames=("tile_b", "matmul_bf16"))
def actor_forward(obs, params, *, tile_b=8192, matmul_bf16=False):
    """obs: (B, obs_dim) f32.  Returns (mean (B, act_dim), std (act_dim,))."""
    w1, b1, w2, b2, w3, b3, log_std = params
    B, obs_dim = obs.shape
    act_dim = w3.shape[1]

    # Optional bf16 matmul operands (MXU path); biases / tanh / output stay f32.
    if matmul_bf16:
        obs_in = obs.astype(jnp.bfloat16)
        w1_in, w2_in, w3_in = (w.astype(jnp.bfloat16) for w in (w1, w2, w3))
    else:
        obs_in, w1_in, w2_in, w3_in = obs, w1, w2, w3

    # --- batch tiling --------------------------------------------------------
    tb = min(tile_b, _round_up(B, _SUBLANE))
    # Keep >= 2 grid steps whenever the batch allows it so both TensorCores
    # get work on v7x (batch axis is "parallel"); harmless on v5e/v6e.
    if B >= 2 * _SUBLANE:
        tb = min(tb, _round_up((B + 1) // 2, _SUBLANE))
    tb = _round_up(tb, _SUBLANE)
    Bp = _round_up(B, tb)
    obs_p = obs_in if Bp == B else jnp.pad(obs_in, ((0, Bp - B), (0, 0)))

    grid = (Bp // tb,)
    batch_spec = lambda last: pl.BlockSpec((tb, last), lambda i: (i, 0))
    resident = lambda arr: pl.BlockSpec(arr.shape, lambda i: (0, 0))

    mean_p = pl.pallas_call(
        actor_kernel,
        out_shape=jax.ShapeDtypeStruct((Bp, act_dim), jnp.float32),
        grid=grid,
        in_specs=[
            batch_spec(obs_dim),   # obs tile, streamed / double-buffered
            resident(w1_in), resident(b1),
            resident(w2_in), resident(b2),
            resident(w3_in), resident(b3),
        ],
        out_specs=batch_spec(act_dim),
        compiler_params=pltpu.CompilerParams(
            dimension_semantics=("parallel",),
            vmem_limit_bytes=48 << 20),
    )(obs_p, w1_in, b1, w2_in, b2, w3_in, b3)

    mean = mean_p[:B]
    # std = exp(log_std): state-independent, hoisted out of the kernel.
    std = jnp.exp(log_std.reshape(-1))
    return mean, std


def init_actor_params(key, obs_dim, act_dim, hidden_dim=64):
    """Deterministic synthetic init (same shapes/roles as the nn.Module)."""
    k1, k2, k3 = jax.random.split(key, 3)
    scale = 0.1
    w1 = scale * jax.random.normal(k1, (obs_dim, hidden_dim), jnp.float32)
    b1 = jnp.zeros((1, hidden_dim), jnp.float32)
    w2 = scale * jax.random.normal(k2, (hidden_dim, hidden_dim), jnp.float32)
    b2 = jnp.zeros((1, hidden_dim), jnp.float32)
    w3 = scale * jax.random.normal(k3, (hidden_dim, act_dim), jnp.float32)
    b3 = jnp.zeros((1, act_dim), jnp.float32)
    log_std = jnp.zeros((1, act_dim), jnp.float32)  # nn.Parameter(torch.zeros(act_dim))
    return (w1, b1, w2, b2, w3, b3, log_std)


def actor_forward_ref(obs, params):
    """Pure-JAX reference for correctness checking."""
    w1, b1, w2, b2, w3, b3, log_std = params
    x = jnp.tanh(obs @ w1 + b1)
    x = jnp.tanh(x @ w2 + b2)
    mean = x @ w3 + b3
    std = jnp.exp(log_std.reshape(-1))
    return mean, std


if __name__ == "__main__":
    obs_dim, act_dim, hidden_dim = 16, 8, 32

    key = jax.random.PRNGKey(0)
    k_obs, k_obs2, k_par = jax.random.split(key, 3)
    params = init_actor_params(k_par, obs_dim, act_dim, hidden_dim)

    # Small test (single grid step; tile clamps to the batch).
    batch = 8
    obs = jax.random.normal(k_obs, (batch, obs_dim), jnp.float32)
    mean, std = actor_forward(obs, params)
    jax.block_until_ready((mean, std))
    mean_ref, std_ref = actor_forward_ref(obs, params)
    assert mean.shape == (batch, act_dim)
    assert std.shape == (act_dim,)
    assert jnp.allclose(mean, mean_ref, atol=1e-5, rtol=1e-5)
    assert jnp.allclose(std, std_ref, atol=1e-6, rtol=1e-6)

    # Ragged-batch test (exercises the grid, batch padding and the >=2-step
    # megacore cap).
    batch2 = 200
    obs2 = jax.random.normal(k_obs2, (batch2, obs_dim), jnp.float32)
    mean2, std2 = actor_forward(obs2, params, tile_b=128)
    jax.block_until_ready((mean2, std2))
    mean2_ref, _ = actor_forward_ref(obs2, params)
    assert mean2.shape == (batch2, act_dim)
    assert jnp.allclose(mean2, mean2_ref, atol=1e-5, rtol=1e-5)

    # Optional bf16 matmul-operand path (looser tolerance: deliberate numerics
    # change).
    mean3, _ = actor_forward(obs2, params, tile_b=128, matmul_bf16=True)
    jax.block_until_ready(mean3)
    assert jnp.allclose(mean3, mean2_ref, atol=2e-2, rtol=2e-2)

    print("KERNEL_OK")
</pallas_src>

<mosaic_0001>
module attributes {stable_mosaic.version = 11 : i64} {
  func.func @actor_kernel(%arg0: i32, %arg1: memref<8x16xf32, #tpu.memory_space<vmem>>, %arg2: memref<16x32xf32, #tpu.memory_space<vmem>>, %arg3: memref<1x32xf32, #tpu.memory_space<vmem>>, %arg4: memref<32x32xf32, #tpu.memory_space<vmem>>, %arg5: memref<1x32xf32, #tpu.memory_space<vmem>>, %arg6: memref<32x8xf32, #tpu.memory_space<vmem>>, %arg7: memref<1x8xf32, #tpu.memory_space<vmem>>, %arg8: memref<8x8xf32, #tpu.memory_space<vmem>>) attributes {dimension_semantics = [#tpu.dimension_semantics<parallel>], iteration_bounds = array<i64: 1>, scalar_prefetch = 0 : i64, scratch_operands = 0 : i64, tpu.core_type = #tpu.core_type<tc>, window_params = [{transform_indices = @transform_0, window_bounds = array<i64: 8, 16>}, {pipeline_mode = #tpu.pipeline_mode<synchronous>, transform_indices = @transform_1, window_bounds = array<i64: 16, 32>}, {pipeline_mode = #tpu.pipeline_mode<synchronous>, transform_indices = @transform_2, window_bounds = array<i64: 1, 32>}, {pipeline_mode = #tpu.pipeline_mode<synchronous>, transform_indices = @transform_3, window_bounds = array<i64: 32, 32>}, {pipeline_mode = #tpu.pipeline_mode<synchronous>, transform_indices = @transform_4, window_bounds = array<i64: 1, 32>}, {pipeline_mode = #tpu.pipeline_mode<synchronous>, transform_indices = @transform_5, window_bounds = array<i64: 32, 8>}, {pipeline_mode = #tpu.pipeline_mode<synchronous>, transform_indices = @transform_6, window_bounds = array<i64: 1, 8>}, {transform_indices = @transform_7, window_bounds = array<i64: 8, 8>}]} {
    %c0 = arith.constant 0 : index
    %c0_0 = arith.constant 0 : index
    %0 = vector.load %arg1[%c0, %c0_0] : memref<8x16xf32, #tpu.memory_space<vmem>>, vector<8x16xf32>
    %c0_1 = arith.constant 0 : index
    %c0_2 = arith.constant 0 : index
    %1 = vector.load %arg2[%c0_1, %c0_2] : memref<16x32xf32, #tpu.memory_space<vmem>>, vector<16x32xf32>
    %cst = arith.constant dense<0.000000e+00> : vector<8x32xf32>
    %2 = tpu.matmul %0, %1, %cst {dimension_numbers = #tpu.dot_dimension_numbers<[1], [0], [0], [1], [0, 0, 1, 1], [], []>} : vector<8x16xf32>, vector<16x32xf32>, vector<8x32xf32> -> vector<8x32xf32>
    %c0_3 = arith.constant 0 : index
    %c0_4 = arith.constant 0 : index
    %3 = vector.load %arg3[%c0_3, %c0_4] : memref<1x32xf32, #tpu.memory_space<vmem>>, vector<1x32xf32>
    %4 = vector.broadcast %3 : vector<1x32xf32> to vector<8x32xf32>
    %5 = arith.addf %2, %4 : vector<8x32xf32>
    %6 = math.tanh %5 : vector<8x32xf32>
    %c0_5 = arith.constant 0 : index
    %c0_6 = arith.constant 0 : index
    %7 = vector.load %arg4[%c0_5, %c0_6] : memref<32x32xf32, #tpu.memory_space<vmem>>, vector<32x32xf32>
    %cst_7 = arith.constant dense<0.000000e+00> : vector<8x32xf32>
    %8 = tpu.matmul %6, %7, %cst_7 {dimension_numbers = #tpu.dot_dimension_numbers<[1], [0], [0], [1], [0, 0, 1, 1], [], []>} : vector<8x32xf32>, vector<32x32xf32>, vector<8x32xf32> -> vector<8x32xf32>
    %c0_8 = arith.constant 0 : index
    %c0_9 = arith.constant 0 : index
    %9 = vector.load %arg5[%c0_8, %c0_9] : memref<1x32xf32, #tpu.memory_space<vmem>>, vector<1x32xf32>
    %10 = vector.broadcast %9 : vector<1x32xf32> to vector<8x32xf32>
    %11 = arith.addf %8, %10 : vector<8x32xf32>
    %12 = math.tanh %11 : vector<8x32xf32>
    %c0_10 = arith.constant 0 : index
    %c0_11 = arith.constant 0 : index
    %13 = vector.load %arg6[%c0_10, %c0_11] : memref<32x8xf32, #tpu.memory_space<vmem>>, vector<32x8xf32>
    %cst_12 = arith.constant dense<0.000000e+00> : vector<8x8xf32>
    %14 = tpu.matmul %12, %13, %cst_12 {dimension_numbers = #tpu.dot_dimension_numbers<[1], [0], [0], [1], [0, 0, 1, 1], [], []>} : vector<8x32xf32>, vector<32x8xf32>, vector<8x8xf32> -> vector<8x8xf32>
    %c0_13 = arith.constant 0 : index
    %c0_14 = arith.constant 0 : index
    %15 = vector.load %arg7[%c0_13, %c0_14] : memref<1x8xf32, #tpu.memory_space<vmem>>, vector<1x8xf32>
    %16 = vector.broadcast %15 : vector<1x8xf32> to vector<8x8xf32>
    %17 = arith.addf %14, %16 : vector<8x8xf32>
    %c0_15 = arith.constant 0 : index
    %c0_16 = arith.constant 0 : index
    %18 = vector.load %arg8[%c0_15, %c0_16] : memref<8x8xf32, #tpu.memory_space<vmem>>, vector<8x8xf32>
    tpu.vector_store %arg8[%c0_15, %c0_16], %17 {strides = array<i32>} : memref<8x8xf32, #tpu.memory_space<vmem>>, vector<8x8xf32>,
    return
  }
  func.func @transform_0(%arg0: i32) -> (i32, i32) {
    %c0_i32 = arith.constant 0 : i32
    %c0_i32_0 = arith.constant 0 : i32
    return %arg0, %c0_i32 : i32, i32
  }
  func.func @transform_1(%arg0: i32) -> (i32, i32) {
    %c0_i32 = arith.constant 0 : i32
    %c0_i32_0 = arith.constant 0 : i32
    %c0_i32_1 = arith.constant 0 : i32
    return %c0_i32, %c0_i32_0 : i32, i32
  }
  func.func @transform_2(%arg0: i32) -> (i32, i32) {
    %c0_i32 = arith.constant 0 : i32
    %c0_i32_0 = arith.constant 0 : i32
    %c0_i32_1 = arith.constant 0 : i32
    return %c0_i32, %c0_i32_0 : i32, i32
  }
  func.func @transform_3(%arg0: i32) -> (i32, i32) {
    %c0_i32 = arith.constant 0 : i32
    %c0_i32_0 = arith.constant 0 : i32
    %c0_i32_1 = arith.constant 0 : i32
    return %c0_i32, %c0_i32_0 : i32, i32
  }
  func.func @transform_4(%arg0: i32) -> (i32, i32) {
    %c0_i32 = arith.constant 0 : i32
    %c0_i32_0 = arith.constant 0 : i32
    %c0_i32_1 = arith.constant 0 : i32
    return %c0_i32, %c0_i32_0 : i32, i32
  }
  func.func @transform_5(%arg0: i32) -> (i32, i32) {
    %c0_i32 = arith.constant 0 : i32
    %c0_i32_0 = arith.constant 0 : i32
    %c0_i32_1 = arith.constant 0 : i32
    return %c0_i32, %c0_i32_0 : i32, i32
  }
  func.func @transform_6(%arg0: i32) -> (i32, i32) {
    %c0_i32 = arith.constant 0 : i32
    %c0_i32_0 = arith.constant 0 : i32
    %c0_i32_1 = arith.constant 0 : i32
    return %c0_i32, %c0_i32_0 : i32, i32
  }
  func.func @transform_7(%arg0: i32) -> (i32, i32) {
    %c0_i32 = arith.constant 0 : i32
    %c0_i32_0 = arith.constant 0 : i32
    return %arg0, %c0_i32 : i32, i32
  }
}

</mosaic_0001>

<llo_original>
// kernel: actor_forward.1
$region0: #{actor_forward.1}
  #allocation0 [shape = 'u32[]', space=smem, size = 0x4, offset = 0x4, fixed_abs, tag = 'smem constant byte address 0x4 - core index']
  #allocation1 [shape = 'u32[144,128]{1,0:T(1,128)}', space=vmem, size = 0x12000, scoped, tag = 'internal scratch']
  %s0 = inlined_call_operand.hbm [shape: f32[8,16], index: 0, kind: input, shape index: {}]
  %s1 = inlined_call_operand.vmem [shape: f32[16,32], index: 1, kind: input, shape index: {}]
  %s2 = inlined_call_operand.vmem [shape: f32[1,32], index: 2, kind: input, shape index: {}]
  %s3 = inlined_call_operand.vmem [shape: f32[32,32], index: 3, kind: input, shape index: {}]
  %s4 = inlined_call_operand.vmem [shape: f32[1,32], index: 4, kind: input, shape index: {}]
  %s5 = inlined_call_operand.vmem [shape: f32[32,8], index: 5, kind: input, shape index: {}]
  %s6 = inlined_call_operand.hbm [shape: f32[1,8], index: 6, kind: input, shape index: {}]
  %s7 = inlined_call_operand.hbm [shape: f32[8,8], index: 7, kind: output, shape index: {}]
  %s8 = sld [smem:[#allocation0]]
  $region46: #{actor_forward.1} parent=0
    _
  %s10 = ssub.s32 1, %s8
  %s11 = scalar_select 0, %s10, %s8
  $region1: #{actor_forward.1} parent=0
    #allocation2 [shape = 'u8[4096]{0}', space=vmem, size = 0x1000, scoped, tag = 'input window, operand 0, single buffered']
    #allocation3 [shape = 's32[1]{0}', space=sflag, size = 0x4, scoped, tag = 'scoped memory for actor_forward.1']
    #allocation4 [shape = 's32[1]{0}', space=sflag, size = 0x4, scoped, tag = 'scoped memory for actor_forward.1']
    #allocation5 [shape = 'u8[512]{0}', space=vmem, size = 0x400, scoped, tag = 'input window, operand 6, single buffered']
    #allocation6 [shape = 's32[1]{0}', space=sflag, size = 0x4, scoped, tag = 'scoped memory for actor_forward.1']
    #allocation7 [shape = 'u8[4096]{0}', space=vmem, size = 0x1000, scoped, tag = 'output window, operand 0, single buffered']
    %12 = vsyncpa [#allocation3], 0
    %13 = vsyncpa [#allocation6], 0
    %14 = vsyncpa [#allocation4], 0
    // Predicated region
    $region2: #{actor_forward.1} parent=1 // pred_check
      _
    $region3: #{actor_forward.1} parent=1 // pred_check_branch
      %16 = sbr.rel (0) target = $region5
    $region4: #{actor_forward.1} parent=1 // pred_region
      %s18 = ssub.s32 128, 128
      %19 = vsyncadd [#allocation3], %s18
      %s21 = sshll.u32 [#allocation2], 4
      %s22 = int_to_ptr.vmem [resolvable:$true] %s21
      %24 = dma.hbm_to_vmem [thread:$0]  %s0, 128, %s22, [#allocation3]
    $region5: #{actor_forward.1} parent=1 // pred_fallthru
      _
    // Predicated region
    $region6: #{actor_forward.1} parent=1 // pred_check
      _
    $region7: #{actor_forward.1} parent=1 // pred_check_branch
      %26 = sbr.rel (0) target = $region9
    $region8: #{actor_forward.1} parent=1 // pred_region
      _
    $region9: #{actor_forward.1} parent=1 // pred_fallthru
      _
    // Predicated region
    $region10: #{actor_forward.1} parent=1 // pred_check
      _
    $region11: #{actor_forward.1} parent=1 // pred_check_branch
      %28 = sbr.rel (0) target = $region13
    $region12: #{actor_forward.1} parent=1 // pred_region
      _
    $region13: #{actor_forward.1} parent=1 // pred_fallthru
      _
    // Predicated region
    $region14: #{actor_forward.1} parent=1 // pred_check
      _
    $region15: #{actor_forward.1} parent=1 // pred_check_branch
      %30 = sbr.rel (0) target = $region17
    $region16: #{actor_forward.1} parent=1 // pred_region
      _
    $region17: #{actor_forward.1} parent=1 // pred_fallthru
      _
    // Predicated region
    $region18: #{actor_forward.1} parent=1 // pred_check
      _
    $region19: #{actor_forward.1} parent=1 // pred_check_branch
      %32 = sbr.rel (0) target = $region21
    $region20: #{actor_forward.1} parent=1 // pred_region
      _
    $region21: #{actor_forward.1} parent=1 // pred_fallthru
      _
    // Predicated region
    $region22: #{actor_forward.1} parent=1 // pred_check
      _
    $region23: #{actor_forward.1} parent=1 // pred_check_branch
      %34 = sbr.rel (0) target = $region25
    $region24: #{actor_forward.1} parent=1 // pred_region
      _
    $region25: #{actor_forward.1} parent=1 // pred_fallthru
      _
    // Predicated region
    $region26: #{actor_forward.1} parent=1 // pred_check
      _
    $region27: #{actor_forward.1} parent=1 // pred_check_branch
      %36 = sbr.rel (0) target = $region29
    $region28: #{actor_forward.1} parent=1 // pred_region
      %s38 = ssub.s32 16, 16
      %39 = vsyncadd [#allocation6], %s38
      %s41 = sshll.u32 [#allocation5], 4
      %s42 = int_to_ptr.vmem [resolvable:$true] %s41
      %44 = dma.hbm_to_vmem [thread:$0]  %s6, 16, %s42, [#allocation6]
    $region29: #{actor_forward.1} parent=1 // pred_fallthru
      _
    // Predicated region
    $region30: #{actor_forward.1} parent=1 // pred_check
      _
    $region31: #{actor_forward.1} parent=1 // pred_check_branch
      %46 = sbr.rel (0) target = $region33
    $region32: #{actor_forward.1} parent=1 // pred_region
      %47 = dma.done [#allocation3], 128
    $region33: #{actor_forward.1} parent=1 // pred_fallthru
      _
    // Predicated region
    $region34: #{actor_forward.1} parent=1 // pred_check
      _
    $region35: #{actor_forward.1} parent=1 // pred_check_branch
      %49 = sbr.rel (0) target = $region37
    $region36: #{actor_forward.1} parent=1 // pred_region
      %50 = dma.done [#allocation6], 16
    $region37: #{actor_forward.1} parent=1 // pred_fallthru
      _
    %v51 = vld [vmem:[#allocation2] sm:$0xff]
    %v52 = vld [vmem:[%s1] sm:$0xff]
    %v53 = vld [vmem:[%s1 + $0x8] sm:$0xff]
    %v54 = vld [vmem:[%s2] sm:$0x1]
    %v56 = vlaneseq
    %v57 = vshrl.u32 %v56, 7
    %v58 = vsub.s32 0, %v57
    %v59 = vrot.slane %v54, %v58
    %vm61 = vcmask 130048
    %v63 = vsel %vm61, %v51, 0
    %65 = vmatprep.subr.mxu0 0.0
    %66 = vmatpush1.msra.mxu0 %v52
    %67 = vmatprep.subr.mxu0 0.0
    %68 = vmatpush1.msra.mxu0 %v53
    %69 = vmatprep.subr.mxu0 0.0
    %70 = vmatpush1.msra.mxu0 0.0
    %71 = vmatprep.subr.mxu0 0.0
    %72 = vmatpush1.msra.mxu0 0.0
    %73 = vmatprep.subr.mxu0 0.0
    %74 = vmatpush1.msra.mxu0 0.0
    %75 = vmatprep.subr.mxu0 0.0
    %76 = vmatpush1.msra.mxu0 0.0
    %77 = vmatprep.subr.mxu0 0.0
    %78 = vmatpush1.msra.mxu0 0.0
    %79 = vmatprep.subr.mxu0 0.0
    %80 = vmatpush1.msra.mxu0 0.0
    %81 = vmatprep.subr.mxu0 0.0
    %82 = vmatpush1.msra.mxu0 0.0
    %83 = vmatprep.subr.mxu0 0.0
    %84 = vmatpush1.msra.mxu0 0.0
    %85 = vmatprep.subr.mxu0 0.0
    %86 = vmatpush1.msra.mxu0 0.0
    %87 = vmatprep.subr.mxu0 0.0
    %88 = vmatpush1.msra.mxu0 0.0
    %89 = vmatprep.subr.mxu0 0.0
    %90 = vmatpush1.msra.mxu0 0.0
    %91 = vmatprep.subr.mxu0 0.0
    %92 = vmatpush1.msra.mxu0 0.0
    %93 = vmatprep.subr.mxu0 0.0
    %94 = vmatpush1.msra.mxu0 0.0
    %95 = vmatprep.subr.mxu0 0.0
    %96 = vmatpush1.msra.mxu0 0.0
    %97 = vmatprep.subr.mxu0 0.0
    %98 = vmatpush1.msra.mxu0 0.0
    %99 = vmatprep.subr.mxu0 0.0
    %100 = vmatpush1.msra.mxu0 0.0
    %101 = vmatprep.subr.mxu0 0.0
    %102 = vmatpush1.msra.mxu0 0.0
    %103 = vmatprep.subr.mxu0 0.0
    %104 = vmatpush1.msra.mxu0 0.0
    %105 = vmatprep.subr.mxu0 0.0
    %106 = vmatpush1.msra.mxu0 0.0
    %107 = vmatprep.subr.mxu0 0.0
    %108 = vmatpush1.msra.mxu0 0.0
    %109 = vmatprep.subr.mxu0 0.0
    %110 = vmatpush1.msra.mxu0 0.0
    %111 = vmatprep.subr.mxu0 0.0
    %112 = vmatpush1.msra.mxu0 0.0
    %113 = vmatprep.subr.mxu0 0.0
    %114 = vmatpush1.msra.mxu0 0.0
    %115 = vmatprep.subr.mxu0 0.0
    %116 = vmatpush1.msra.mxu0 0.0
    %117 = vmatprep.subr.mxu0 0.0
    %118 = vmatpush1.msra.mxu0 0.0
    %119 = vmatprep.subr.mxu0 0.0
    %120 = vmatpush1.msra.mxu0 0.0
    %121 = vmatprep.subr.mxu0 0.0
    %122 = vmatpush1.msra.mxu0 0.0
    %123 = vmatprep.subr.mxu0 0.0
    %124 = vmatpush1.msra.mxu0 0.0
    %125 = vmatprep.subr.mxu0 0.0
    %126 = vmatpush1.msra.mxu0 0.0
    %127 = vmatprep.subr.mxu0 0.0
    %128 = vmatpush1.msra.mxu0 0.0
    %129 = vmatprep.mubr.f32.mxu0 0.0
    %130 = vmatmul.mubr.f32.gmra.mrb[0].mxu0 %v63
    %v131 = vpop.f32.mrb[0].mxu0
    %v132 = vadd.f32 %v59, %v131
    %v133 = vpop.f32.mrb[0].mxu0
    %134 = vdwg.mxu0
    %v135 = vtanh.pop %v132
    %v136 = vld [vmem:[%s3] sm:$0xff]
    %v137 = vld [vmem:[%s3 + $0x8] sm:$0xff]
    %v138 = vld [vmem:[%s3 + $0x10] sm:$0xff]
    %v139 = vld [vmem:[%s3 + $0x18] sm:$0xff]
    %v140 = vld [vmem:[%s4] sm:$0x1]
    %v142 = vlaneseq
    %v143 = vshrl.u32 %v142, 7
    %v144 = vsub.s32 0, %v143
    %v145 = vrot.slane %v140, %v144
    %vm147 = vcmask 261120
    %v149 = vsel %vm147, %v135, 0
    %151 = vmatprep.subr.mxu0 0.0
    %152 = vmatpush1.msra.mxu0 %v136
    %153 = vmatprep.subr.mxu0 0.0
    %154 = vmatpush1.msra.mxu0 %v137
    %155 = vmatprep.subr.mxu0 0.0
    %156 = vmatpush1.msra.mxu0 %v138
    %157 = vmatprep.subr.mxu0 0.0
    %158 = vmatpush1.msra.mxu0 %v139
    %159 = vmatprep.subr.mxu0 0.0
    %160 = vmatpush1.msra.mxu0 0.0
    %161 = vmatprep.subr.mxu0 0.0
    %162 = vmatpush1.msra.mxu0 0.0
    %163 = vmatprep.subr.mxu0 0.0
    %164 = vmatpush1.msra.mxu0 0.0
    %165 = vmatprep.subr.mxu0 0.0
    %166 = vmatpush1.msra.mxu0 0.0
    %167 = vmatprep.subr.mxu0 0.0
    %168 = vmatpush1.msra.mxu0 0.0
    %169 = vmatprep.subr.mxu0 0.0
    %170 = vmatpush1.msra.mxu0 0.0
    %171 = vmatprep.subr.mxu0 0.0
    %172 = vmatpush1.msra.mxu0 0.0
    %173 = vmatprep.subr.mxu0 0.0
    %174 = vmatpush1.msra.mxu0 0.0
    %175 = vmatprep.subr.mxu0 0.0
    %176 = vmatpush1.msra.mxu0 0.0
    %177 = vmatprep.subr.mxu0 0.0
    %178 = vmatpush1.msra.mxu0 0.0
    %179 = vmatprep.subr.mxu0 0.0
    %180 = vmatpush1.msra.mxu0 0.0
    %181 = vmatprep.subr.mxu0 0.0
    %182 = vmatpush1.msra.mxu0 0.0
    %183 = vmatprep.subr.mxu0 0.0
    %184 = vmatpush1.msra.mxu0 0.0
    %185 = vmatprep.subr.mxu0 0.0
    %186 = vmatpush1.msra.mxu0 0.0
    %187 = vmatprep.subr.mxu0 0.0
    %188 = vmatpush1.msra.mxu0 0.0
    %189 = vmatprep.subr.mxu0 0.0
    %190 = vmatpush1.msra.mxu0 0.0
    %191 = vmatprep.subr.mxu0 0.0
    %192 = vmatpush1.msra.mxu0 0.0
    %193 = vmatprep.subr.mxu0 0.0
    %194 = vmatpush1.msra.mxu0 0.0
    %195 = vmatprep.subr.mxu0 0.0
    %196 = vmatpush1.msra.mxu0 0.0
    %197 = vmatprep.subr.mxu0 0.0
    %198 = vmatpush1.msra.mxu0 0.0
    %199 = vmatprep.subr.mxu0 0.0
    %200 = vmatpush1.msra.mxu0 0.0
    %201 = vmatprep.subr.mxu0 0.0
    %202 = vmatpush1.msra.mxu0 0.0
    %203 = vmatprep.subr.mxu0 0.0
    %204 = vmatpush1.msra.mxu0 0.0
    %205 = vmatprep.subr.mxu0 0.0
    %206 = vmatpush1.msra.mxu0 0.0
    %207 = vmatprep.subr.mxu0 0.0
    %208 = vmatpush1.msra.mxu0 0.0
    %209 = vmatprep.subr.mxu0 0.0
    %210 = vmatpush1.msra.mxu0 0.0
    %211 = vmatprep.subr.mxu0 0.0
    %212 = vmatpush1.msra.mxu0 0.0
    %213 = vmatprep.subr.mxu0 0.0
    %214 = vmatpush1.msra.mxu0 0.0
    %215 = vmatprep.mubr.f32.mxu0 0.0
    %216 = vmatmul.mubr.f32.gmra.mrb[0].mxu0 %v149
    %v217 = vpop.f32.mrb[0].mxu0
    %v218 = vadd.f32 %v145, %v217
    %v219 = vpop.f32.mrb[0].mxu0
    %220 = vdwg.mxu0
    %v221 = vtanh.pop %v218
    %v222 = vld [vmem:[%s5] sm:$0xff]
    %v223 = vld [vmem:[%s5 + $0x8] sm:$0xff]
    %v224 = vld [vmem:[%s5 + $0x10] sm:$0xff]
    %v225 = vld [vmem:[%s5 + $0x18] sm:$0xff]
    %v226 = vld [vmem:[#allocation5] sm:$0x1]
    %v228 = vlaneseq
    %v229 = vshrl.u32 %v228, 7
    %v230 = vsub.s32 0, %v229
    %v231 = vrot.slane %v226, %v230
    %v234 = vsel %vm147, %v221, 0
    %236 = vmatprep.subr.mxu0 0.0
    %237 = vmatpush1.msra.mxu0 %v222
    %238 = vmatprep.subr.mxu0 0.0
    %239 = vmatpush1.msra.mxu0 %v223
    %240 = vmatprep.subr.mxu0 0.0
    %241 = vmatpush1.msra.mxu0 %v224
    %242 = vmatprep.subr.mxu0 0.0
    %243 = vmatpush1.msra.mxu0 %v225
    %244 = vmatprep.subr.mxu0 0.0
    %245 = vmatpush1.msra.mxu0 0.0
    %246 = vmatprep.subr.mxu0 0.0
    %247 = vmatpush1.msra.mxu0 0.0
    %248 = vmatprep.subr.mxu0 0.0
    %249 = vmatpush1.msra.mxu0 0.0
    %250 = vmatprep.subr.mxu0 0.0
    %251 = vmatpush1.msra.mxu0 0.0
    %252 = vmatprep.subr.mxu0 0.0
    %253 = vmatpush1.msra.mxu0 0.0
    %254 = vmatprep.subr.mxu0 0.0
    %255 = vmatpush1.msra.mxu0 0.0
    %256 = vmatprep.subr.mxu0 0.0
    %257 = vmatpush1.msra.mxu0 0.0
    %258 = vmatprep.subr.mxu0 0.0
    %259 = vmatpush1.msra.mxu0 0.0
    %260 = vmatprep.subr.mxu0 0.0
    %261 = vmatpush1.msra.mxu0 0.0
    %262 = vmatprep.subr.mxu0 0.0
    %263 = vmatpush1.msra.mxu0 0.0
    %264 = vmatprep.subr.mxu0 0.0
    %265 = vmatpush1.msra.mxu0 0.0
    %266 = vmatprep.subr.mxu0 0.0
    %267 = vmatpush1.msra.mxu0 0.0
    %268 = vmatprep.subr.mxu0 0.0
    %269 = vmatpush1.msra.mxu0 0.0
    %270 = vmatprep.subr.mxu0 0.0
    %271 = vmatpush1.msra.mxu0 0.0
    %272 = vmatprep.subr.mxu0 0.0
    %273 = vmatpush1.msra.mxu0 0.0
    %274 = vmatprep.subr.mxu0 0.0
    %275 = vmatpush1.msra.mxu0 0.0
    %276 = vmatprep.subr.mxu0 0.0
    %277 = vmatpush1.msra.mxu0 0.0
    %278 = vmatprep.subr.mxu0 0.0
    %279 = vmatpush1.msra.mxu0 0.0
    %280 = vmatprep.subr.mxu0 0.0
    %281 = vmatpush1.msra.mxu0 0.0
    %282 = vmatprep.subr.mxu0 0.0
    %283 = vmatpush1.msra.mxu0 0.0
    %284 = vmatprep.subr.mxu0 0.0
    %285 = vmatpush1.msra.mxu0 0.0
    %286 = vmatprep.subr.mxu0 0.0
    %287 = vmatpush1.msra.mxu0 0.0
    %288 = vmatprep.subr.mxu0 0.0
    %289 = vmatpush1.msra.mxu0 0.0
    %290 = vmatprep.subr.mxu0 0.0
    %291 = vmatpush1.msra.mxu0 0.0
    %292 = vmatprep.subr.mxu0 0.0
    %293 = vmatpush1.msra.mxu0 0.0
    %294 = vmatprep.subr.mxu0 0.0
    %295 = vmatpush1.msra.mxu0 0.0
    %296 = vmatprep.subr.mxu0 0.0
    %297 = vmatpush1.msra.mxu0 0.0
    %298 = vmatprep.subr.mxu0 0.0
    %299 = vmatpush1.msra.mxu0 0.0
    %300 = vmatprep.mubr.f32.mxu0 0.0
    %301 = vmatmul.mubr.f32.gmra.mrb[0].mxu0 %v234
    %v302 = vpop.f32.mrb[0].mxu0
    %v303 = vadd.f32 %v231, %v302
    %v304 = vpop.f32.mrb[0].mxu0
    %305 = vdwg.mxu0
    %vm306 = vcmask 64512
    %307 = vst.msk [vmem:[#allocation7] sm:$0xff] %vm306, %v303
    // Predicated region
    $region38: #{actor_forward.1} parent=1 // pred_check
      _
    $region39: #{actor_forward.1} parent=1 // pred_check_branch
      %309 = sbr.rel (0) target = $region41
    $region40: #{actor_forward.1} parent=1 // pred_region
      %s311 = ssub.s32 128, 128
      %312 = vsyncadd [#allocation4], %s311
      %s314 = sshll.u32 [#allocation7], 4
      %s315 = int_to_ptr.vmem [resolvable:$true] %s314
      %317 = dma.vmem_to_hbm [thread:$0]  %s315, 128, %s7, [#allocation4]
    $region41: #{actor_forward.1} parent=1 // pred_fallthru
      _
    // Predicated region
    $region42: #{actor_forward.1} parent=1 // pred_check
      _
    $region43: #{actor_forward.1} parent=1 // pred_check_branch
      %319 = sbr.rel (0) target = $region45
    $region44: #{actor_forward.1} parent=1 // pred_region
      %320 = dma.done [#allocation4], 128
    $region45: #{actor_forward.1} parent=1 // pred_fallthru
      _
    %321 = vsyncpa [#allocation3], 1
    %322 = vsyncpa [#allocation6], 1
    %323 = vsyncpa [#allocation4], 1

</llo_original>
